<compile_context>
chip_gen: v7x
topology: tpu7x:2x2x1
jax: 0.10.0
libtpu: 0.0.40
codegen_flags: <defaults>
</compile_context>

<pallas_src>
import functools

import jax
import jax.numpy as jnp
from jax.experimental import pallas as pl
from jax.experimental.pallas import tpu as pltpu

LANE = 128
SUBLANE = 8


def _round_up(n, m):
    return ((n + m - 1) // m) * m


def _actor_kernel(x_ref, w1_ref, b1_ref, w2_ref, b2_ref, act_ref):
    # bf16 operands into the MXU, f32 accumulation + elementwise math.
    h = jnp.dot(x_ref[...], w1_ref[...], preferred_element_type=jnp.float32)
    h = jnp.maximum(h + b1_ref[...], 0.0)                      # bias + ReLU in f32
    a = jnp.dot(h.astype(w2_ref.dtype), w2_ref[...],
                preferred_element_type=jnp.float32)
    a = a + b2_ref[...]                                        # bias in f32
    act_ref[...] = jnp.tanh(a).astype(act_ref.dtype)           # lane-dense store


@functools.partial(jax.jit, static_argnames=("block_b",))
def redq_actor_forward(x, w1, b1, w2, b2, block_b=512):
    """Pallas equivalent of DummyREDQActorWrapper.forward."""
    B, S = x.shape
    H = w1.shape[1]
    A = w2.shape[1]

    # Lane-dense output width and sublane-aligned batch tile.
    A_pad = _round_up(A, LANE)
    TB = min(block_b, _round_up(B, SUBLANE))
    B_pad = _round_up(B, TB)

    # bf16 matmul operands (pad batch rows / output columns with zeros);
    # biases stay f32 so the elementwise path is f32 on every TPU generation.
    x_p = jnp.zeros((B_pad, S), jnp.bfloat16).at[:B, :].set(x.astype(jnp.bfloat16))
    w1_b = w1.astype(jnp.bfloat16)
    w2_p = jnp.zeros((H, A_pad), jnp.bfloat16).at[:, :A].set(w2.astype(jnp.bfloat16))
    b1_f = b1.reshape(1, H).astype(jnp.float32)
    b2_p = jnp.zeros((1, A_pad), jnp.float32).at[:, :A].set(
        b2.reshape(1, A).astype(jnp.float32))

    grid = (B_pad // TB,)
    act_pad = pl.pallas_call(
        _actor_kernel,
        out_shape=jax.ShapeDtypeStruct((B_pad, A_pad), jnp.float32),
        grid_spec=pltpu.PrefetchScalarGridSpec(
            num_scalar_prefetch=0,
            grid=grid,
            in_specs=[
                pl.BlockSpec((TB, S), lambda i: (i, 0)),     # streamed per tile
                pl.BlockSpec((S, H), lambda i: (0, 0)),      # resident weights
                pl.BlockSpec((1, H), lambda i: (0, 0)),
                pl.BlockSpec((H, A_pad), lambda i: (0, 0)),
                pl.BlockSpec((1, A_pad), lambda i: (0, 0)),
            ],
            out_specs=pl.BlockSpec((TB, A_pad), lambda i: (i, 0)),
        ),
        compiler_params=pltpu.CompilerParams(
            # Batch axis is embarrassingly parallel -> shard across TCs on v7x.
            dimension_semantics=("parallel",),
        ),
    )(x_p, w1_b, b1_f, w2_p, b2_p)

    action = act_pad[:B, :A]
    # Dummy logprob is a compile-time constant: build it wrapper-side, not in
    # the kernel (avoids a lane-width-1 masked-store output stream).
    logp = jnp.zeros((B,), jnp.float32)
    return {"action": action, "action_logprob": logp}


def init_params(key, dim_state, hidden, dim_act):
    k1, k2, k3, k4 = jax.random.split(key, 4)
    w1 = jax.random.normal(k1, (dim_state, hidden), jnp.float32) * 0.1
    b1 = jax.random.normal(k2, (1, hidden), jnp.float32) * 0.01
    w2 = jax.random.normal(k3, (hidden, dim_act), jnp.float32) * 0.1
    b2 = jax.random.normal(k4, (1, dim_act), jnp.float32) * 0.01
    return w1, b1, w2, b2


if __name__ == "__main__":
    dim_state, hidden, dim_act, batch = 32, 32, 8, 2

    key = jax.random.PRNGKey(0)
    kx, kp = jax.random.split(key)
    x = jax.random.normal(kx, (batch, dim_state), jnp.float32)
    w1, b1, w2, b2 = init_params(kp, dim_state, hidden, dim_act)

    out = redq_actor_forward(x, w1, b1, w2, b2)
    jax.block_until_ready(out)

    # Pure-JAX f32 reference of the same forward pass (bf16 MXU inputs in the
    # kernel => compare with a looser tolerance than the all-f32 version).
    ref_action = jnp.tanh(jnp.maximum(x @ w1 + b1, 0.0) @ w2 + b2)
    assert out["action"].shape == (batch, dim_act)
    assert out["action_logprob"].shape == (batch,)
    assert jnp.allclose(out["action"], ref_action, atol=2e-2), (
        float(jnp.max(jnp.abs(out["action"] - ref_action))))
    assert jnp.all(out["action_logprob"] == 0.0)

    print("KERNEL_OK")
</pallas_src>

<mosaic_0001>
module attributes {stable_mosaic.version = 11 : i64} {
  func.func @_actor_kernel(%arg0: i32, %arg1: memref<8x32xbf16, #tpu.memory_space<vmem>>, %arg2: memref<32x32xbf16, #tpu.memory_space<vmem>>, %arg3: memref<1x32xf32, #tpu.memory_space<vmem>>, %arg4: memref<32x128xbf16, #tpu.memory_space<vmem>>, %arg5: memref<1x128xf32, #tpu.memory_space<vmem>>, %arg6: memref<8x128xf32, #tpu.memory_space<vmem>>) attributes {dimension_semantics = [#tpu.dimension_semantics<parallel>], iteration_bounds = array<i64: 1>, scalar_prefetch = 0 : i64, scratch_operands = 0 : i64, tpu.core_type = #tpu.core_type<tc>, window_params = [{transform_indices = @transform_0, window_bounds = array<i64: 8, 32>}, {pipeline_mode = #tpu.pipeline_mode<synchronous>, transform_indices = @transform_1, window_bounds = array<i64: 32, 32>}, {pipeline_mode = #tpu.pipeline_mode<synchronous>, transform_indices = @transform_2, window_bounds = array<i64: 1, 32>}, {pipeline_mode = #tpu.pipeline_mode<synchronous>, transform_indices = @transform_3, window_bounds = array<i64: 32, 128>}, {pipeline_mode = #tpu.pipeline_mode<synchronous>, transform_indices = @transform_4, window_bounds = array<i64: 1, 128>}, {transform_indices = @transform_5, window_bounds = array<i64: 8, 128>}]} {
    %c0 = arith.constant 0 : index
    %c0_0 = arith.constant 0 : index
    %0 = vector.load %arg1[%c0, %c0_0] : memref<8x32xbf16, #tpu.memory_space<vmem>>, vector<8x32xbf16>
    %c0_1 = arith.constant 0 : index
    %c0_2 = arith.constant 0 : index
    %1 = vector.load %arg2[%c0_1, %c0_2] : memref<32x32xbf16, #tpu.memory_space<vmem>>, vector<32x32xbf16>
    %cst = arith.constant dense<0.000000e+00> : vector<8x32xf32>
    %2 = tpu.matmul %0, %1, %cst {dimension_numbers = #tpu.dot_dimension_numbers<[1], [0], [0], [1], [0, 0, 1, 1], [], []>} : vector<8x32xbf16>, vector<32x32xbf16>, vector<8x32xf32> -> vector<8x32xf32>
    %c0_3 = arith.constant 0 : index
    %c0_4 = arith.constant 0 : index
    %3 = vector.load %arg3[%c0_3, %c0_4] : memref<1x32xf32, #tpu.memory_space<vmem>>, vector<1x32xf32>
    %4 = vector.broadcast %3 : vector<1x32xf32> to vector<8x32xf32>
    %5 = arith.addf %2, %4 : vector<8x32xf32>
    %cst_5 = arith.constant 0.000000e+00 : f32
    %6 = vector.broadcast %cst_5 : f32 to vector<8x32xf32>
    %7 = arith.maximumf %5, %6 : vector<8x32xf32>
    %8 = arith.truncf %7 : vector<8x32xf32> to vector<8x32xbf16>
    %c0_6 = arith.constant 0 : index
    %c0_7 = arith.constant 0 : index
    %9 = vector.load %arg4[%c0_6, %c0_7] : memref<32x128xbf16, #tpu.memory_space<vmem>>, vector<32x128xbf16>
    %cst_8 = arith.constant dense<0.000000e+00> : vector<8x128xf32>
    %10 = tpu.matmul %8, %9, %cst_8 {dimension_numbers = #tpu.dot_dimension_numbers<[1], [0], [0], [1], [0, 0, 1, 1], [], []>} : vector<8x32xbf16>, vector<32x128xbf16>, vector<8x128xf32> -> vector<8x128xf32>
    %c0_9 = arith.constant 0 : index
    %c0_10 = arith.constant 0 : index
    %11 = vector.load %arg5[%c0_9, %c0_10] : memref<1x128xf32, #tpu.memory_space<vmem>>, vector<1x128xf32>
    %12 = vector.broadcast %11 : vector<1x128xf32> to vector<8x128xf32>
    %13 = arith.addf %10, %12 : vector<8x128xf32>
    %14 = math.tanh %13 : vector<8x128xf32>
    %c0_11 = arith.constant 0 : index
    %c0_12 = arith.constant 0 : index
    %15 = vector.load %arg6[%c0_11, %c0_12] : memref<8x128xf32, #tpu.memory_space<vmem>>, vector<8x128xf32>
    tpu.vector_store %arg6[%c0_11, %c0_12], %14 {strides = array<i32>} : memref<8x128xf32, #tpu.memory_space<vmem>>, vector<8x128xf32>,
    return
  }
  func.func @transform_0(%arg0: i32) -> (i32, i32) {
    %c0_i32 = arith.constant 0 : i32
    %c0_i32_0 = arith.constant 0 : i32
    return %arg0, %c0_i32 : i32, i32
  }
  func.func @transform_1(%arg0: i32) -> (i32, i32) {
    %c0_i32 = arith.constant 0 : i32
    %c0_i32_0 = arith.constant 0 : i32
    %c0_i32_1 = arith.constant 0 : i32
    return %c0_i32, %c0_i32_0 : i32, i32
  }
  func.func @transform_2(%arg0: i32) -> (i32, i32) {
    %c0_i32 = arith.constant 0 : i32
    %c0_i32_0 = arith.constant 0 : i32
    %c0_i32_1 = arith.constant 0 : i32
    return %c0_i32, %c0_i32_0 : i32, i32
  }
  func.func @transform_3(%arg0: i32) -> (i32, i32) {
    %c0_i32 = arith.constant 0 : i32
    %c0_i32_0 = arith.constant 0 : i32
    %c0_i32_1 = arith.constant 0 : i32
    return %c0_i32, %c0_i32_0 : i32, i32
  }
  func.func @transform_4(%arg0: i32) -> (i32, i32) {
    %c0_i32 = arith.constant 0 : i32
    %c0_i32_0 = arith.constant 0 : i32
    %c0_i32_1 = arith.constant 0 : i32
    return %c0_i32, %c0_i32_0 : i32, i32
  }
  func.func @transform_5(%arg0: i32) -> (i32, i32) {
    %c0_i32 = arith.constant 0 : i32
    %c0_i32_0 = arith.constant 0 : i32
    return %arg0, %c0_i32 : i32, i32
  }
}

</mosaic_0001>

<llo_original>
// kernel: redq_actor_forward.1
$region0: #{redq_actor_forward.1}
  #allocation0 [shape = 'u32[]', space=smem, size = 0x4, offset = 0x4, fixed_abs, tag = 'smem constant byte address 0x4 - core index']
  #allocation1 [shape = 'u32[144,128]{1,0:T(1,128)}', space=vmem, size = 0x12000, scoped, tag = 'internal scratch']
  %s0 = inlined_call_operand.vmem [shape: bf16[8,32], index: 0, kind: input, shape index: {}]
  %s1 = inlined_call_operand.vmem [shape: bf16[32,32], index: 1, kind: input, shape index: {}]
  %s2 = inlined_call_operand.vmem [shape: f32[1,32], index: 2, kind: input, shape index: {}]
  %s3 = inlined_call_operand.vmem [shape: bf16[32,128], index: 3, kind: input, shape index: {}]
  %s4 = inlined_call_operand.vmem [shape: f32[1,128], index: 4, kind: input, shape index: {}]
  %s5 = inlined_call_operand.vmem [shape: f32[8,128], index: 5, kind: output, shape index: {}]
  %s6 = sld [smem:[#allocation0]]
  $region30: #{redq_actor_forward.1} parent=0
    _
  %s8 = ssub.s32 1, %s6
  %s9 = scalar_select 0, %s8, %s6
  // Predicated region
  $region2: #{redq_actor_forward.1} parent=0 // pred_check
    _
  $region3: #{redq_actor_forward.1} parent=0 // pred_check_branch
    %11 = sbr.rel (0) target = $region5
  $region4: #{redq_actor_forward.1} parent=0 // pred_region
    _
  $region5: #{redq_actor_forward.1} parent=0 // pred_fallthru
    _
  // Predicated region
  $region6: #{redq_actor_forward.1} parent=0 // pred_check
    _
  $region7: #{redq_actor_forward.1} parent=0 // pred_check_branch
    %13 = sbr.rel (0) target = $region9
  $region8: #{redq_actor_forward.1} parent=0 // pred_region
    _
  $region9: #{redq_actor_forward.1} parent=0 // pred_fallthru
    _
  // Predicated region
  $region10: #{redq_actor_forward.1} parent=0 // pred_check
    _
  $region11: #{redq_actor_forward.1} parent=0 // pred_check_branch
    %15 = sbr.rel (0) target = $region13
  $region12: #{redq_actor_forward.1} parent=0 // pred_region
    _
  $region13: #{redq_actor_forward.1} parent=0 // pred_fallthru
    _
  // Predicated region
  $region14: #{redq_actor_forward.1} parent=0 // pred_check
    _
  $region15: #{redq_actor_forward.1} parent=0 // pred_check_branch
    %17 = sbr.rel (0) target = $region17
  $region16: #{redq_actor_forward.1} parent=0 // pred_region
    _
  $region17: #{redq_actor_forward.1} parent=0 // pred_fallthru
    _
  // Predicated region
  $region18: #{redq_actor_forward.1} parent=0 // pred_check
    _
  $region19: #{redq_actor_forward.1} parent=0 // pred_check_branch
    %19 = sbr.rel (0) target = $region21
  $region20: #{redq_actor_forward.1} parent=0 // pred_region
    _
  $region21: #{redq_actor_forward.1} parent=0 // pred_fallthru
    _
  %v21 = vld [vmem:[%s0] sm:$0xf]
  %v22 = vld [vmem:[%s1] sm:$0xf]
  %v23 = vld [vmem:[%s1 + $0x4] sm:$0xf]
  %v24 = vld [vmem:[%s1 + $0x8] sm:$0xf]
  %v25 = vld [vmem:[%s1 + $0xc] sm:$0xf]
  %v26 = vld [vmem:[%s2] sm:$0x1]
  %v28 = vlaneseq
  %v29 = vshrl.u32 %v28, 7
  %v30 = vsub.s32 0, %v29
  %v31 = vrot.slane %v26, %v30
  %v37 = vunpack.c.l.b16 %v22
  %v38 = vunpack.c.l.b16 %v23
  %v39 = vunpack.c.l.b16 %v24
  %v40 = vunpack.c.l.b16 %v25
  %v41 = vpack.c.b16 %v38, %v37
  %v42 = vpack.c.b16 %v40, %v39
  %vm45 = vcmask 261120
  %v47 = vsel %vm45, %v21, 0
  %49 = vmatprep.subr.bf16.mxu0 0
  %50 = vmatpush1.bf16.msra.mxu0 %v41
  %51 = vmatprep.subr.bf16.mxu0 0
  %52 = vmatpush1.bf16.msra.mxu0 %v42
  %53 = vmatprep.subr.bf16.mxu0 0
  %54 = vmatpush1.bf16.msra.mxu0 0
  %55 = vmatprep.subr.bf16.mxu0 0
  %56 = vmatpush1.bf16.msra.mxu0 0
  %57 = vmatprep.subr.bf16.mxu0 0
  %58 = vmatpush1.bf16.msra.mxu0 0
  %59 = vmatprep.subr.bf16.mxu0 0
  %60 = vmatpush1.bf16.msra.mxu0 0
  %61 = vmatprep.subr.bf16.mxu0 0
  %62 = vmatpush1.bf16.msra.mxu0 0
  %63 = vmatprep.subr.bf16.mxu0 0
  %64 = vmatpush1.bf16.msra.mxu0 0
  %65 = vmatprep.subr.bf16.mxu0 0
  %66 = vmatpush1.bf16.msra.mxu0 0
  %67 = vmatprep.subr.bf16.mxu0 0
  %68 = vmatpush1.bf16.msra.mxu0 0
  %69 = vmatprep.subr.bf16.mxu0 0
  %70 = vmatpush1.bf16.msra.mxu0 0
  %71 = vmatprep.subr.bf16.mxu0 0
  %72 = vmatpush1.bf16.msra.mxu0 0
  %73 = vmatprep.subr.bf16.mxu0 0
  %74 = vmatpush1.bf16.msra.mxu0 0
  %75 = vmatprep.subr.bf16.mxu0 0
  %76 = vmatpush1.bf16.msra.mxu0 0
  %77 = vmatprep.subr.bf16.mxu0 0
  %78 = vmatpush1.bf16.msra.mxu0 0
  %79 = vmatprep.subr.bf16.mxu0 0
  %80 = vmatpush1.bf16.msra.mxu0 0
  %81 = vmatprep.mubr.bf16.mxu0 0
  %82 = vmatmul.mubr.bf16.gmra.mrb[0].mxu0 %v47
  %v83 = vpop.f32.mrb[0].mxu0
  %v84 = vadd.f32 %v31, %v83
  %v85 = vpop.f32.mrb[0].mxu0
  %v86 = vpop.f32.mrb[0].mxu0
  %v87 = vpop.f32.mrb[0].mxu0
  %88 = vdwg.mxu0
  %v89 = vmax.f32 %v84, 0.0
  %v90 = vpack.c.bf16 %v89, %v89
  %v91 = vld [vmem:[%s3] sm:$0xf]
  %v92 = vld [vmem:[%s3 + $0x4] sm:$0xf]
  %v93 = vld [vmem:[%s3 + $0x8] sm:$0xf]
  %v94 = vld [vmem:[%s3 + $0xc] sm:$0xf]
  %v95 = vld [vmem:[%s4] sm:$0x1]
  %v97 = vlaneseq
  %v98 = vshrl.u32 %v97, 7
  %v99 = vsub.s32 0, %v98
  %v100 = vrot.slane %v95, %v99
  %v106 = vunpack.c.l.b16 %v91
  %v107 = vunpack.c.l.b16 %v92
  %v108 = vunpack.c.l.b16 %v93
  %v109 = vunpack.c.l.b16 %v94
  %v110 = vpack.c.b16 %v107, %v106
  %v111 = vpack.c.b16 %v109, %v108
  %v115 = vsel %vm45, %v90, 0
  %117 = vmatprep.subr.bf16.mxu0 0
  %118 = vmatpush1.bf16.msra.mxu0 %v110
  %119 = vmatprep.subr.bf16.mxu0 0
  %120 = vmatpush1.bf16.msra.mxu0 %v111
  %121 = vmatprep.subr.bf16.mxu0 0
  %122 = vmatpush1.bf16.msra.mxu0 0
  %123 = vmatprep.subr.bf16.mxu0 0
  %124 = vmatpush1.bf16.msra.mxu0 0
  %125 = vmatprep.subr.bf16.mxu0 0
  %126 = vmatpush1.bf16.msra.mxu0 0
  %127 = vmatprep.subr.bf16.mxu0 0
  %128 = vmatpush1.bf16.msra.mxu0 0
  %129 = vmatprep.subr.bf16.mxu0 0
  %130 = vmatpush1.bf16.msra.mxu0 0
  %131 = vmatprep.subr.bf16.mxu0 0
  %132 = vmatpush1.bf16.msra.mxu0 0
  %133 = vmatprep.subr.bf16.mxu0 0
  %134 = vmatpush1.bf16.msra.mxu0 0
  %135 = vmatprep.subr.bf16.mxu0 0
  %136 = vmatpush1.bf16.msra.mxu0 0
  %137 = vmatprep.subr.bf16.mxu0 0
  %138 = vmatpush1.bf16.msra.mxu0 0
  %139 = vmatprep.subr.bf16.mxu0 0
  %140 = vmatpush1.bf16.msra.mxu0 0
  %141 = vmatprep.subr.bf16.mxu0 0
  %142 = vmatpush1.bf16.msra.mxu0 0
  %143 = vmatprep.subr.bf16.mxu0 0
  %144 = vmatpush1.bf16.msra.mxu0 0
  %145 = vmatprep.subr.bf16.mxu0 0
  %146 = vmatpush1.bf16.msra.mxu0 0
  %147 = vmatprep.subr.bf16.mxu0 0
  %148 = vmatpush1.bf16.msra.mxu0 0
  %149 = vmatprep.mubr.bf16.mxu0 0
  %150 = vmatmul.mubr.bf16.gmra.mrb[0].mxu0 %v115
  %v151 = vpop.f32.mrb[0].mxu0
  %v152 = vadd.f32 %v100, %v151
  %v153 = vpop.f32.mrb[0].mxu0
  %v154 = vpop.f32.mrb[0].mxu0
  %v155 = vpop.f32.mrb[0].mxu0
  %156 = vdwg.mxu0
  %v157 = vtanh.pop %v152
  %158 = vst [vmem:[%s5] sm:$0xff] %v157
  // Predicated region
  $region22: #{redq_actor_forward.1} parent=0 // pred_check
    _
  $region23: #{redq_actor_forward.1} parent=0 // pred_check_branch
    %160 = sbr.rel (0) target = $region25
  $region24: #{redq_actor_forward.1} parent=0 // pred_region
    _
  $region25: #{redq_actor_forward.1} parent=0 // pred_fallthru
    _
  // Predicated region
  $region26: #{redq_actor_forward.1} parent=0 // pred_check
    _
  $region27: #{redq_actor_forward.1} parent=0 // pred_check_branch
    %162 = sbr.rel (0) target = $region29
  $region28: #{redq_actor_forward.1} parent=0 // pred_region
    _
  $region29: #{redq_actor_forward.1} parent=0 // pred_fallthru
    _

</llo_original>
